<compile_context>
chip_gen: v7x
topology: tpu7x:2x2x1
jax: 0.10.0
libtpu: 0.0.40
codegen_flags: <defaults>
</compile_context>

<pallas_src>
import math
from functools import partial

import numpy as np
import jax
import jax.numpy as jnp
from jax.experimental import pallas as pl
from jax.experimental.pallas import tpu as pltpu


# ---------------------------------------------------------------------------
# Mosaic-safe math helpers (used inside kernels only)
# ---------------------------------------------------------------------------

_GELU_C = 0.7978845608028654          # sqrt(2/pi)


def _gelu(x):                          # tanh-approximation GELU (EUP tanh)
    return 0.5 * x * (1.0 + jnp.tanh(_GELU_C * (x + 0.044715 * x * x * x)))


def _sigmoid(x):
    return pl.reciprocal(1.0 + jnp.exp(-x), approx=True)


def _silu(x):
    return x * _sigmoid(x)


def _softplus(x):
    return jnp.maximum(x, 0.0) + jnp.log(1.0 + jnp.exp(-jnp.abs(x)))


def _ln(x, g, b, eps=1e-5):
    mu = jnp.mean(x, axis=-1, keepdims=True)
    xc = x - mu
    var = jnp.mean(xc * xc, axis=-1, keepdims=True)
    return xc * jax.lax.rsqrt(var + eps) * g + b


def _mm(a, w):
    # bf16 x bf16 MXU matmul with f32 accumulation (weights are pre-cast bf16)
    return jnp.dot(a.astype(jnp.bfloat16), w.astype(jnp.bfloat16),
                   preferred_element_type=jnp.float32)


# ---------------------------------------------------------------------------
# BlockSpec helpers
# ---------------------------------------------------------------------------

def _full_spec(shape):
    rank = len(shape)
    return pl.BlockSpec(tuple(shape), lambda *args: (0,) * rank)


def _stacked_spec(shape):
    # leading dim = depth; one (1, ...) slab per grid step
    rank = len(shape)
    return pl.BlockSpec((1,) + tuple(shape[1:]),
                        lambda d: (d,) + (0,) * (rank - 1))


def _single_call(kernel, out_shape, *arrays):
    """One pallas_call, grid=(1,), every operand as a single full VMEM tile."""
    return pl.pallas_call(
        kernel,
        out_shape=jax.ShapeDtypeStruct(out_shape, jnp.float32),
        grid=(1,),
        in_specs=[_full_spec(a.shape) for a in arrays],
        out_specs=_full_spec(out_shape),
        compiler_params=pltpu.CompilerParams(dimension_semantics=("arbitrary",)),
    )(*arrays)


# ---------------------------------------------------------------------------
# Fused kernels
# ---------------------------------------------------------------------------

def _pos_mlp_kernel(c_ref, w1e_ref, b1e_ref, w2e_ref, b2e_ref,
                    w1d_ref, b1d_ref, w2d_ref, b2d_ref, o_ref):
    """Encoder + decoder positional MLPs fused; one lane-dense (M, E+Dd) store."""
    c = c_ref[...]                                               # (M, 3)

    def mlp(w1, b1, w2, b2):
        # K=3 first layer as VPU broadcast MACs (MXU would be ~empty for K=3)
        h = (c[:, 0:1] * w1[0:1, :] + c[:, 1:2] * w1[1:2, :]
             + c[:, 2:3] * w1[2:3, :] + b1)
        return _mm(_gelu(h), w2) + b2

    enc = mlp(w1e_ref[...], b1e_ref[...], w2e_ref[...], b2e_ref[...])
    dec = mlp(w1d_ref[...], b1d_ref[...], w2d_ref[...], b2d_ref[...])
    o_ref[...] = jnp.concatenate([enc, dec], axis=-1)


def _patch_embed_kernel(x_ref, w_ref, b_ref, g_ref, beta_ref, o_ref):
    h = _mm(x_ref[...], w_ref[...]) + b_ref[...]
    o_ref[...] = _ln(h, g_ref[...], beta_ref[...])


def _norm_linear_kernel(x_ref, g_ref, b_ref, w_ref, bias_ref, o_ref):
    h = _ln(x_ref[...], g_ref[...], b_ref[...])
    o_ref[...] = _mm(h, w_ref[...]) + bias_ref[...]


def _mamba_stack_kernel(hid_in_ref,
                        ng_ref, nb_ref, inw_ref, cw_ref, cb_ref,
                        xpdt_ref, xpbc_ref, dtw_ref, dtb_ref, a_ref, dvec_ref,
                        outw_ref,
                        fng_ref, fnb_ref, decw_ref, decb_ref,
                        o_ref,
                        hid_vmem, res_vmem,
                        *, B, L, di, ds, Kc):
    """Whole Mamba encoder stack.  grid=(depth,), activations live in VMEM scratch.
    Final encoder LayerNorm + decoder_embed fused into the last grid step."""
    d_idx = pl.program_id(0)

    @pl.when(d_idx == 0)
    def _():
        hid_vmem[...] = hid_in_ref[...]
        res_vmem[...] = jnp.zeros_like(res_vmem)     # first block: residual = hidden

    # Add -> LN, batched over all B*L tokens (DropPath == identity in eval).
    res = res_vmem[...] + hid_vmem[...]              # (B*L, E)
    xb = _ln(res, ng_ref[0], nb_ref[0])

    # in_proj: one batched MXU matmul
    xz = _mm(xb, inw_ref[0])                         # (B*L, 2*di)
    xh = xz[:, :di]
    z = xz[:, di:]

    # depthwise causal conv: Kc shifted full-width FMAs per batch (no masks)
    cw = cw_ref[0]                                   # (Kc, di)
    cb = cb_ref[0]                                   # (1, di)
    xc_parts = []
    for b in range(B):
        rows = xh[b * L:(b + 1) * L, :]              # (L, di)
        xpad = jnp.concatenate(
            [jnp.zeros((Kc - 1, di), jnp.float32), rows], axis=0)
        acc = cb
        for k in range(Kc):
            acc = acc + cw[k:k + 1, :] * xpad[k:k + L, :]
        xc_parts.append(_silu(acc))
    xc = jnp.concatenate(xc_parts, axis=0)           # (B*L, di)

    # x_proj / dt_proj, batched over all tokens (f32; tiny K dims)
    dt_in = jnp.dot(xc, xpdt_ref[0], preferred_element_type=jnp.float32)
    bct = jax.lax.dot_general(xpbc_ref[0], xc, (((1,), (1,)), ((), ())),
                              preferred_element_type=jnp.float32)   # (2ds, B*L)
    dt = _softplus(jnp.dot(dt_in, dtw_ref[0], preferred_element_type=jnp.float32)
                   + dtb_ref[0])                                     # (B*L, di)

    A = a_ref[0]                                      # (ds, di) = -exp(A_log)^T
    u = dt * xc

    # selective scan: sequential over time, rows collected and concatenated once
    y_rows = []
    for b in range(B):
        h = jnp.zeros((ds, di), jnp.float32)
        for t in range(L):
            r = b * L + t
            dA = jnp.exp(dt[r:r + 1, :] * A)                  # (ds, di)
            dBx = bct[0:ds, r:r + 1] * u[r:r + 1, :]          # (ds, di)
            h = dA * h + dBx
            y_rows.append(jnp.sum(bct[ds:2 * ds, r:r + 1] * h,
                                  axis=0, keepdims=True))     # (1, di)
    y = jnp.concatenate(y_rows, axis=0)                       # (B*L, di)

    y = (y + xc * dvec_ref[0]) * _silu(z)
    hid_new = _mm(y, outw_ref[0])                             # (B*L, E)

    hid_vmem[...] = hid_new
    res_vmem[...] = res

    @pl.when(d_idx == pl.num_programs(0) - 1)
    def _():
        hn = _ln(hid_new, fng_ref[...], fnb_ref[...])
        o_ref[...] = _mm(hn, decw_ref[...]) + decb_ref[...]


def _vit_stack_kernel(x_in_ref, bias_ref,
                      n1g_ref, n1b_ref, qkvw_ref, qkvb_ref, pw_ref, pb_ref,
                      n2g_ref, n2b_ref, f1w_ref, f1b_ref, f2w_ref, f2b_ref,
                      o_ref, x_vmem,
                      *, H, Dh, scale):
    """Whole ViT decoder stack.  grid=(depth,), activations in VMEM scratch.
    Attention uses a precomputed additive block-diagonal bias (built once in the
    wrapper); per-head outputs are concatenated and projected with ONE matmul."""
    d_idx = pl.program_id(0)

    @pl.when(d_idx == 0)
    def _():
        x_vmem[...] = x_in_ref[...]

    x = x_vmem[...]                                   # (M, D)
    D = H * Dh
    bias = bias_ref[...]                              # (M, M) additive mask, f32

    h = _ln(x, n1g_ref[0], n1b_ref[0])
    qkv = _mm(h, qkvw_ref[0]) + qkvb_ref[0]           # (M, 3D)

    heads = []
    for hd in range(H):                               # heads = static lane slices
        q = qkv[:, hd * Dh:(hd + 1) * Dh]
        k = qkv[:, D + hd * Dh:D + (hd + 1) * Dh]
        v = qkv[:, 2 * D + hd * Dh:2 * D + (hd + 1) * Dh]
        s = jax.lax.dot_general(q.astype(jnp.bfloat16), k.astype(jnp.bfloat16),
                                (((1,), (1,)), ((), ())),
                                preferred_element_type=jnp.float32) * scale + bias
        s = s - jnp.max(s, axis=-1, keepdims=True)
        p = jnp.exp(s)
        p = p * pl.reciprocal(jnp.sum(p, axis=-1, keepdims=True), approx=True)
        heads.append(_mm(p, v))                       # (M, Dh)
    attn = jnp.concatenate(heads, axis=-1)            # (M, D)
    x = x + _mm(attn, pw_ref[0]) + pb_ref[0]

    h2 = _ln(x, n2g_ref[0], n2b_ref[0])
    f = _gelu(_mm(h2, f1w_ref[0]) + f1b_ref[0])
    x = x + _mm(f, f2w_ref[0]) + f2b_ref[0]

    x_vmem[...] = x

    @pl.when(d_idx == pl.num_programs(0) - 1)
    def _():
        o_ref[...] = x


def _chamfer_kernel(p_ref, t_ref, o_ref, *, G, P1, P2):
    """ChamferDistanceL1 over all G groups; 2-D ops per group, scalar output."""
    s1 = jnp.zeros((1, 1), jnp.float32)
    s2 = jnp.zeros((1, 1), jnp.float32)
    for g in range(G):
        pg = p_ref[g]                                 # (P1, 3)
        tg = t_ref[g]                                 # (3, P2)
        dx = pg[:, 0:1] - tg[0:1, :]
        dy = pg[:, 1:2] - tg[1:2, :]
        dz = pg[:, 2:3] - tg[2:3, :]
        d = dx * dx + dy * dy + dz * dz               # (P1, P2)
        d1 = jnp.sqrt(jnp.min(d, axis=1, keepdims=True))   # (P1, 1)
        d2 = jnp.sqrt(jnp.min(d, axis=0, keepdims=True))   # (1, P2)
        s1 = s1 + jnp.sum(d1, axis=0, keepdims=True)
        s2 = s2 + jnp.sum(d2, axis=1, keepdims=True)
    o_ref[...] = 0.5 * (s1 / float(G * P1) + s2 / float(G * P2))


# ---------------------------------------------------------------------------
# Stack-kernel launchers
# ---------------------------------------------------------------------------

def _run_mamba_stack(enc, dims, tokens_flat, B, L, E, Dd):
    nd = enc['ng'].shape[0]
    stacked = ['ng', 'nb', 'inw', 'cw', 'cb', 'xpdt', 'xpbc',
               'dtw', 'dtb', 'A', 'D', 'outw']
    const = ['fng', 'fnb', 'decw', 'decb']
    args = [tokens_flat] + [enc[n] for n in stacked] + [enc[n] for n in const]
    in_specs = ([_full_spec(tokens_flat.shape)]
                + [_stacked_spec(enc[n].shape) for n in stacked]
                + [_full_spec(enc[n].shape) for n in const])
    kern = partial(_mamba_stack_kernel, B=B, L=L,
                   di=dims['di'], ds=dims['ds'], Kc=dims['Kc'])
    return pl.pallas_call(
        kern,
        out_shape=jax.ShapeDtypeStruct((B * L, Dd), jnp.float32),
        grid=(nd,),
        in_specs=in_specs,
        out_specs=_full_spec((B * L, Dd)),
        scratch_shapes=[pltpu.VMEM((B * L, E), jnp.float32),
                        pltpu.VMEM((B * L, E), jnp.float32)],
        compiler_params=pltpu.CompilerParams(dimension_semantics=("arbitrary",)),
    )(*args)


def _run_vit_stack(dec, x_flat, attn_bias, H, Dh):
    nd = dec['n1g'].shape[0]
    names = ['n1g', 'n1b', 'qkvw', 'qkvb', 'pw', 'pb',
             'n2g', 'n2b', 'f1w', 'f1b', 'f2w', 'f2b']
    args = [x_flat, attn_bias] + [dec[n] for n in names]
    in_specs = ([_full_spec(x_flat.shape), _full_spec(attn_bias.shape)]
                + [_stacked_spec(dec[n].shape) for n in names])
    M, D = x_flat.shape
    kern = partial(_vit_stack_kernel, H=H, Dh=Dh, scale=Dh ** -0.5)
    return pl.pallas_call(
        kern,
        out_shape=jax.ShapeDtypeStruct((M, D), jnp.float32),
        grid=(nd,),
        in_specs=in_specs,
        out_specs=_full_spec((M, D)),
        scratch_shapes=[pltpu.VMEM((M, D), jnp.float32)],
        compiler_params=pltpu.CompilerParams(dimension_semantics=("arbitrary",)),
    )(*args)


# ---------------------------------------------------------------------------
# One-time weight re-layout (hoisted out of the forward)
# ---------------------------------------------------------------------------

def prepare_kernel_params(params, cfg):
    E, Dd = cfg['embed_dim'], cfg['decoder_embed_dim']
    bf = lambda a: a.astype(jnp.bfloat16)

    prep = {}
    pp, dp = params['pos_embedding'], params['dec_pos_embedding']
    prep['pos'] = (pp['w1'], pp['b1'].reshape(1, -1), bf(pp['w2']), pp['b2'].reshape(1, -1),
                   dp['w1'], dp['b1'].reshape(1, -1), bf(dp['w2']), dp['b2'].reshape(1, -1))
    prep['patch'] = (bf(params['patch_w']), params['patch_b'].reshape(1, E),
                     params['patch_ln_g'].reshape(1, E), params['patch_ln_b'].reshape(1, E))

    blocks = params['blocks']
    m0 = blocks[0]['mamba']
    ds = m0['A_log'].shape[1]
    dtr = m0['dt_w'].shape[0]
    di = m0['in_w'].shape[1] // 2
    stack = lambda f: jnp.stack([f(b) for b in blocks], axis=0)
    prep['enc'] = dict(
        ng=stack(lambda b: b['norm_g'].reshape(1, E)),
        nb=stack(lambda b: b['norm_b'].reshape(1, E)),
        inw=bf(stack(lambda b: b['mamba']['in_w'])),
        cw=stack(lambda b: jnp.transpose(b['mamba']['conv_w'], (1, 0))),
        cb=stack(lambda b: b['mamba']['conv_b'].reshape(1, di)),
        xpdt=stack(lambda b: b['mamba']['xproj_w'][:, :dtr]),
        xpbc=stack(lambda b: jnp.transpose(b['mamba']['xproj_w'][:, dtr:], (1, 0))),
        dtw=stack(lambda b: b['mamba']['dt_w']),
        dtb=stack(lambda b: b['mamba']['dt_b'].reshape(1, di)),
        A=stack(lambda b: -jnp.exp(jnp.transpose(b['mamba']['A_log'], (1, 0)))),
        D=stack(lambda b: b['mamba']['D'].reshape(1, di)),
        outw=bf(stack(lambda b: b['mamba']['out_w'])),
        fng=params['norm_g'].reshape(1, E), fnb=params['norm_b'].reshape(1, E),
        decw=bf(params['dec_embed_w']), decb=params['dec_embed_b'].reshape(1, Dd),
    )
    prep['enc_dims'] = dict(di=di, ds=ds, dtr=dtr, Kc=m0['conv_w'].shape[1])

    dblocks = params['decoder_blocks']
    dstack = lambda f: jnp.stack([f(b) for b in dblocks], axis=0)
    prep['dec'] = dict(
        n1g=dstack(lambda b: b['n1_g'].reshape(1, Dd)),
        n1b=dstack(lambda b: b['n1_b'].reshape(1, Dd)),
        qkvw=bf(dstack(lambda b: b['qkv_w'])),
        qkvb=dstack(lambda b: b['qkv_b'].reshape(1, -1)),
        pw=bf(dstack(lambda b: b['proj_w'])),
        pb=dstack(lambda b: b['proj_b'].reshape(1, Dd)),
        n2g=dstack(lambda b: b['n2_g'].reshape(1, Dd)),
        n2b=dstack(lambda b: b['n2_b'].reshape(1, Dd)),
        f1w=bf(dstack(lambda b: b['fc1_w'])),
        f1b=dstack(lambda b: b['fc1_b'].reshape(1, -1)),
        f2w=bf(dstack(lambda b: b['fc2_w'])),
        f2b=dstack(lambda b: b['fc2_b'].reshape(1, Dd)),
    )

    n_pts = params['to_pointsnew_w'].shape[1]
    n_ft = params['to_features_w'].shape[1]
    pts_cols = ((n_pts + 127) // 128) * 128                   # pad 135 -> 256 lanes
    w_head = jnp.concatenate([params['to_pointsnew_w'],
                              jnp.zeros((Dd, pts_cols - n_pts), jnp.float32),
                              params['to_features_w']], axis=1)
    b_head = jnp.concatenate([params['to_pointsnew_b'],
                              jnp.zeros((pts_cols - n_pts,), jnp.float32),
                              params['to_features_b']]).reshape(1, -1)
    prep['head'] = dict(g=params['dec_norm_g'].reshape(1, Dd),
                        b=params['dec_norm_b'].reshape(1, Dd),
                        w=bf(w_head), bias=b_head,
                        n_pts=n_pts, n_ft=n_ft, pts_cols=pts_cols)
    prep['misc'] = dict(cls_token=params['cls_token'], mask_token=params['mask_token'],
                        enc_cls_pos=params['encoder_cls_token_pos'],
                        dec_cls_pos=params['decoder_cls_token_pos'])
    return prep


# ---------------------------------------------------------------------------
# Forward pass (JAX glue for gathers / concats only)
# ---------------------------------------------------------------------------

def mesh_mae_mamba_forward(prep, faces, feats, centers, Fs, cordinates, rng, cfg):
    del faces  # unused in the reference forward
    B, C, NP, P = feats.shape
    E, Dd = cfg['embed_dim'], cfg['decoder_embed_dim']
    H = cfg['decoder_num_heads']
    Dh = Dd // H

    min_patch_number = int(np.min(np.asarray(Fs)) // 64)
    num_masked = int(cfg['masking_ratio'] * min_patch_number)

    center_of_patches = jnp.sum(centers, axis=2) / 64.0                  # (B, NP, 3)

    # encoder + decoder positional MLPs, fused, lane-dense (B*NP, E+Dd) output
    pos_both = _single_call(_pos_mlp_kernel, (B * NP, E + Dd),
                            center_of_patches.reshape(B * NP, 3), *prep['pos'])
    pos_emb = pos_both[:, :E].reshape(B, NP, E)
    dec_pos = pos_both[:, E:].reshape(B, NP, Dd)

    # to_patch_embedding: Rearrange('b c h p -> b h (p c)') + Linear + LayerNorm
    x = jnp.transpose(feats, (0, 2, 3, 1)).reshape(B * NP, P * C)
    tokens = _single_call(_patch_embed_kernel, (B * NP, E),
                          x, *prep['patch']).reshape(B, NP, E)

    # random masking (matches torch.rand(...).argsort semantics)
    k1, k2 = jax.random.split(rng)
    rand_indices = jnp.argsort(jax.random.uniform(k1, (B, min_patch_number)), axis=-1)
    left_indices = (jnp.argsort(jax.random.uniform(k2, (B, NP - min_patch_number)), axis=-1)
                    + min_patch_number)
    masked_indices = rand_indices[:, :num_masked]
    unmasked_indices = jnp.concatenate([rand_indices[:, num_masked:], left_indices], axis=1)
    batch_range = jnp.arange(B)[:, None]

    misc = prep['misc']
    tokens_unmasked = tokens[batch_range, unmasked_indices]
    cls_tokens = jnp.broadcast_to(misc['cls_token'], (B, 1, E))
    tokens_unmasked = jnp.concatenate([tokens_unmasked, cls_tokens], axis=1)
    enc_cls_pos = jnp.broadcast_to(misc['enc_cls_pos'], (B, 1, E))
    pos_emb_a = jnp.concatenate([pos_emb[batch_range, unmasked_indices], enc_cls_pos], axis=1)
    tokens_unmasked = tokens_unmasked + pos_emb_a                        # (B, S_enc, E)
    S_enc = tokens_unmasked.shape[1]

    # Mamba encoder stack: ONE depth-gridded pallas_call (+ fused norm/dec_embed)
    # TODO(synk): DropPath is stochastic in train mode; treated as identity here.
    dec_tokens_u = _run_mamba_stack(prep['enc'], prep['enc_dims'],
                                    tokens_unmasked.reshape(B * S_enc, E),
                                    B, S_enc, E, Dd).reshape(B, S_enc, Dd)

    mask_tokens = jnp.broadcast_to(misc['mask_token'], (B, num_masked, Dd))
    decoder_tokens = jnp.concatenate([mask_tokens, dec_tokens_u], axis=1)
    dec_cls_pos = jnp.broadcast_to(misc['dec_cls_pos'], (B, 1, Dd))
    dec_pos_full = jnp.concatenate([dec_pos[batch_range, masked_indices],
                                    dec_pos[batch_range, unmasked_indices],
                                    dec_cls_pos], axis=1)
    decoder_tokens = decoder_tokens + dec_pos_full                       # (B, S_dec, Dd)
    S_dec = decoder_tokens.shape[1]

    # ViT decoder stack: ONE depth-gridded pallas_call on the flat (B*S, Dd) tokens
    rb = jnp.repeat(jnp.arange(B), S_dec)
    attn_bias = jnp.where(rb[:, None] == rb[None, :], 0.0, -1e30).astype(jnp.float32)
    x_flat = _run_vit_stack(prep['dec'], decoder_tokens.reshape(B * S_dec, Dd),
                            attn_bias, H, Dh)

    # decoder_norm + both prediction heads fused into one lane-dense (M, 512) matmul
    recovered = x_flat.reshape(B, S_dec, Dd)[:, :num_masked].reshape(B * num_masked, Dd)
    hd = prep['head']
    head_out = _single_call(_norm_linear_kernel,
                            (B * num_masked, hd['pts_cols'] + hd['n_ft']),
                            recovered, hd['g'], hd['b'], hd['w'], hd['bias'])

    pred_vert = head_out[:, :hd['n_pts']].reshape(B, num_masked, 45, 3)
    center = jnp.sum(centers[batch_range, masked_indices], axis=2) / 64.0
    pred_vert = (pred_vert + center[:, :, None, :]).reshape(B * num_masked, 45, 3)

    pred_feats = head_out[:, hd['pts_cols']:].reshape(B, num_masked, C, P)
    masked_feats = feats[batch_range, :, masked_indices]                 # (B, nm, C, P)
    feats_con_loss = jnp.mean(jnp.square(pred_feats - masked_feats))

    cord = cordinates[batch_range, masked_indices].reshape(B * num_masked, -1, 3)
    # TODO(synk): torch.unique(dim=2) has a data-dependent output shape; no static-shape
    # JAX/Pallas equivalent exists -- the full (possibly duplicated) vertex set is used.
    G, P2 = cord.shape[0], cord.shape[1]
    shape_con_loss = _single_call(
        partial(_chamfer_kernel, G=G, P1=pred_vert.shape[1], P2=P2),
        (1, 1), pred_vert, jnp.transpose(cord, (0, 2, 1)))[0, 0]

    return feats_con_loss + cfg['weight'] * shape_con_loss


# ---------------------------------------------------------------------------
# Deterministic parameter init (shapes follow the module __init__, small dims)
# ---------------------------------------------------------------------------

def init_params(key, cfg):
    E, Dd, C = cfg['embed_dim'], cfg['decoder_embed_dim'], cfg['channels']
    P, ds, d_conv = 64, 16, 4
    di = 2 * E
    dtr = math.ceil(E / 16)

    keys = iter(jax.random.split(key, 256))

    def nxt():
        return next(keys)

    def xavier(shape):
        lim = math.sqrt(6.0 / (shape[0] + shape[-1]))
        return jax.random.uniform(nxt(), shape, jnp.float32, -lim, lim)

    p = {}
    p['pos_embedding'] = {'w1': xavier((3, 128)), 'b1': jnp.zeros((128,)),
                          'w2': xavier((128, E)), 'b2': jnp.zeros((E,))}
    p['dec_pos_embedding'] = {'w1': xavier((3, 128)), 'b1': jnp.zeros((128,)),
                              'w2': xavier((128, Dd)), 'b2': jnp.zeros((Dd,))}
    p['patch_w'] = xavier((C * P, E)); p['patch_b'] = jnp.zeros((E,))
    p['patch_ln_g'] = jnp.ones((E,)); p['patch_ln_b'] = jnp.zeros((E,))

    blocks = []
    for _ in range(cfg['encoder_depth']):
        mamba = {
            'in_w': xavier((E, 2 * di)),
            'conv_w': 0.1 * jax.random.normal(nxt(), (di, d_conv), jnp.float32),
            'conv_b': jnp.zeros((di,)),
            'xproj_w': xavier((di, dtr + 2 * ds)),
            'dt_w': xavier((dtr, di)),
            'dt_b': jnp.full((di,), float(np.log(np.expm1(0.05))), jnp.float32),
            'A_log': jnp.log(jnp.broadcast_to(jnp.arange(1, ds + 1, dtype=jnp.float32),
                                              (di, ds))),
            'D': jnp.ones((di,), jnp.float32),
            'out_w': xavier((di, E)),
        }
        blocks.append({'norm_g': jnp.ones((E,)), 'norm_b': jnp.zeros((E,)), 'mamba': mamba})
    p['blocks'] = blocks
    p['norm_g'] = jnp.ones((E,)); p['norm_b'] = jnp.zeros((E,))

    p['dec_embed_w'] = xavier((E, Dd)); p['dec_embed_b'] = jnp.zeros((Dd,))
    p['mask_token'] = 0.02 * jax.random.normal(nxt(), (1, 1, Dd), jnp.float32)
    p['cls_token'] = 0.02 * jax.random.normal(nxt(), (1, 1, E), jnp.float32)
    p['decoder_cls_token_pos'] = jnp.zeros((1, 1, Dd))
    p['encoder_cls_token_pos'] = jnp.zeros((1, 1, E))

    dec_blocks = []
    for _ in range(cfg['decoder_depth']):
        dec_blocks.append({
            'n1_g': jnp.ones((Dd,)), 'n1_b': jnp.zeros((Dd,)),
            'qkv_w': xavier((Dd, 3 * Dd)), 'qkv_b': jnp.zeros((3 * Dd,)),
            'proj_w': xavier((Dd, Dd)), 'proj_b': jnp.zeros((Dd,)),
            'n2_g': jnp.ones((Dd,)), 'n2_b': jnp.zeros((Dd,)),
            'fc1_w': xavier((Dd, 4 * Dd)), 'fc1_b': jnp.zeros((4 * Dd,)),
            'fc2_w': xavier((4 * Dd, Dd)), 'fc2_b': jnp.zeros((Dd,)),
        })
    p['decoder_blocks'] = dec_blocks
    p['dec_norm_g'] = jnp.ones((Dd,)); p['dec_norm_b'] = jnp.zeros((Dd,))

    p['to_pointsnew_w'] = xavier((Dd, 45 * 3)); p['to_pointsnew_b'] = jnp.zeros((45 * 3,))
    p['to_features_w'] = xavier((Dd, 64 * C)); p['to_features_b'] = jnp.zeros((64 * C,))
    return p


# ---------------------------------------------------------------------------

if __name__ == "__main__":
    cfg = dict(masking_ratio=0.75, channels=4, embed_dim=64, encoder_depth=2,
               decoder_embed_dim=64, decoder_num_heads=4, decoder_depth=2, weight=0.2)

    key = jax.random.PRNGKey(0)
    kp, kf, kc, kcoord, kmask = jax.random.split(key, 5)
    params = init_params(kp, cfg)
    prep = prepare_kernel_params(params, cfg)      # one-time weight re-layout / bf16 cast

    B, C, NP, P = 2, cfg['channels'], 8, 64
    feats = jax.random.normal(kf, (B, C, NP, P), jnp.float32)
    centers = jax.random.normal(kc, (B, NP, P, 3), jnp.float32)
    cordinates = jax.random.normal(kcoord, (B, NP, P, 9), jnp.float32)
    faces = jnp.zeros((B, NP, P, 3), jnp.int32)          # unused by the forward pass
    Fs = np.array([384, 448], dtype=np.int64)            # min -> 6 valid patches per mesh

    loss = mesh_mae_mamba_forward(prep, faces, feats, centers, Fs, cordinates, kmask, cfg)
    loss = jax.block_until_ready(loss)
    assert np.isfinite(np.asarray(loss))
    print("KERNEL_OK")
</pallas_src>

<mosaic_0001>
module attributes {stable_mosaic.version = 11 : i64} {
  func.func @_pos_mlp_kernel(%arg0: i32, %arg1: memref<16x3xf32, #tpu.memory_space<vmem>>, %arg2: memref<3x128xf32, #tpu.memory_space<vmem>>, %arg3: memref<1x128xf32, #tpu.memory_space<vmem>>, %arg4: memref<128x64xbf16, #tpu.memory_space<vmem>>, %arg5: memref<1x64xf32, #tpu.memory_space<vmem>>, %arg6: memref<3x128xf32, #tpu.memory_space<vmem>>, %arg7: memref<1x128xf32, #tpu.memory_space<vmem>>, %arg8: memref<128x64xbf16, #tpu.memory_space<vmem>>, %arg9: memref<1x64xf32, #tpu.memory_space<vmem>>, %arg10: memref<16x128xf32, #tpu.memory_space<vmem>>) attributes {dimension_semantics = [#tpu.dimension_semantics<arbitrary>], iteration_bounds = array<i64: 1>, scalar_prefetch = 0 : i64, scratch_operands = 0 : i64, tpu.core_type = #tpu.core_type<tc>, window_params = [{pipeline_mode = #tpu.pipeline_mode<synchronous>, transform_indices = @transform_0, window_bounds = array<i64: 16, 3>}, {pipeline_mode = #tpu.pipeline_mode<synchronous>, transform_indices = @transform_1, window_bounds = array<i64: 3, 128>}, {pipeline_mode = #tpu.pipeline_mode<synchronous>, transform_indices = @transform_2, window_bounds = array<i64: 1, 128>}, {pipeline_mode = #tpu.pipeline_mode<synchronous>, transform_indices = @transform_3, window_bounds = array<i64: 128, 64>}, {pipeline_mode = #tpu.pipeline_mode<synchronous>, transform_indices = @transform_4, window_bounds = array<i64: 1, 64>}, {pipeline_mode = #tpu.pipeline_mode<synchronous>, transform_indices = @transform_5, window_bounds = array<i64: 3, 128>}, {pipeline_mode = #tpu.pipeline_mode<synchronous>, transform_indices = @transform_6, window_bounds = array<i64: 1, 128>}, {pipeline_mode = #tpu.pipeline_mode<synchronous>, transform_indices = @transform_7, window_bounds = array<i64: 128, 64>}, {pipeline_mode = #tpu.pipeline_mode<synchronous>, transform_indices = @transform_8, window_bounds = array<i64: 1, 64>}, {pipeline_mode = #tpu.pipeline_mode<synchronous>, transform_indices = @transform_9, window_bounds = array<i64: 16, 128>}]} {
    %c0 = arith.constant 0 : index
    %c0_0 = arith.constant 0 : index
    %0 = vector.load %arg1[%c0, %c0_0] : memref<16x3xf32, #tpu.memory_space<vmem>>, vector<16x3xf32>
    %c0_1 = arith.constant 0 : index
    %c0_2 = arith.constant 0 : index
    %1 = vector.load %arg2[%c0_1, %c0_2] : memref<3x128xf32, #tpu.memory_space<vmem>>, vector<3x128xf32>
    %c0_3 = arith.constant 0 : index
    %c0_4 = arith.constant 0 : index
    %2 = vector.load %arg3[%c0_3, %c0_4] : memref<1x128xf32, #tpu.memory_space<vmem>>, vector<1x128xf32>
    %c0_5 = arith.constant 0 : index
    %c0_6 = arith.constant 0 : index
    %3 = vector.load %arg4[%c0_5, %c0_6] : memref<128x64xbf16, #tpu.memory_space<vmem>>, vector<128x64xbf16>
    %c0_7 = arith.constant 0 : index
    %c0_8 = arith.constant 0 : index
    %4 = vector.load %arg5[%c0_7, %c0_8] : memref<1x64xf32, #tpu.memory_space<vmem>>, vector<1x64xf32>
    %5 = vector.extract_strided_slice %0 {offsets = [0, 0], sizes = [16, 1], strides = [1, 1]} : vector<16x3xf32> to vector<16x1xf32>
    %6 = vector.extract_strided_slice %1 {offsets = [0, 0], sizes = [1, 128], strides = [1, 1]} : vector<3x128xf32> to vector<1x128xf32>
    %7 = vector.broadcast %5 : vector<16x1xf32> to vector<16x128xf32>
    %8 = vector.broadcast %6 : vector<1x128xf32> to vector<16x128xf32>
    %9 = arith.mulf %7, %8 : vector<16x128xf32>
    %10 = vector.extract_strided_slice %0 {offsets = [0, 1], sizes = [16, 1], strides = [1, 1]} : vector<16x3xf32> to vector<16x1xf32>
    %11 = vector.extract_strided_slice %1 {offsets = [1, 0], sizes = [1, 128], strides = [1, 1]} : vector<3x128xf32> to vector<1x128xf32>
    %12 = vector.broadcast %10 : vector<16x1xf32> to vector<16x128xf32>
    %13 = vector.broadcast %11 : vector<1x128xf32> to vector<16x128xf32>
    %14 = arith.mulf %12, %13 : vector<16x128xf32>
    %15 = arith.addf %9, %14 : vector<16x128xf32>
    %16 = vector.extract_strided_slice %0 {offsets = [0, 2], sizes = [16, 1], strides = [1, 1]} : vector<16x3xf32> to vector<16x1xf32>
    %17 = vector.extract_strided_slice %1 {offsets = [2, 0], sizes = [1, 128], strides = [1, 1]} : vector<3x128xf32> to vector<1x128xf32>
    %18 = vector.broadcast %16 : vector<16x1xf32> to vector<16x128xf32>
    %19 = vector.broadcast %17 : vector<1x128xf32> to vector<16x128xf32>
    %20 = arith.mulf %18, %19 : vector<16x128xf32>
    %21 = arith.addf %15, %20 : vector<16x128xf32>
    %22 = vector.broadcast %2 : vector<1x128xf32> to vector<16x128xf32>
    %23 = arith.addf %21, %22 : vector<16x128xf32>
    %cst = arith.constant 5.000000e-01 : f32
    %24 = vector.broadcast %cst : f32 to vector<16x128xf32>
    %25 = arith.mulf %24, %23 : vector<16x128xf32>
    %cst_9 = arith.constant 4.471500e-02 : f32
    %26 = vector.broadcast %cst_9 : f32 to vector<16x128xf32>
    %27 = arith.mulf %26, %23 : vector<16x128xf32>
    %28 = arith.mulf %27, %23 : vector<16x128xf32>
    %29 = arith.mulf %28, %23 : vector<16x128xf32>
    %30 = arith.addf %23, %29 : vector<16x128xf32>
    %cst_10 = arith.constant 0.797884583 : f32
    %31 = vector.broadcast %cst_10 : f32 to vector<16x128xf32>
    %32 = arith.mulf %31, %30 : vector<16x128xf32>
    %33 = math.tanh %32 : vector<16x128xf32>
    %cst_11 = arith.constant 1.000000e+00 : f32
    %34 = vector.broadcast %cst_11 : f32 to vector<16x128xf32>
    %35 = arith.addf %34, %33 : vector<16x128xf32>
    %36 = arith.mulf %25, %35 : vector<16x128xf32>
    %37 = arith.truncf %36 : vector<16x128xf32> to vector<16x128xbf16>
    %cst_12 = arith.constant dense<0.000000e+00> : vector<16x64xf32>
    %38 = tpu.matmul %37, %3, %cst_12 {dimension_numbers = #tpu.dot_dimension_numbers<[1], [0], [0], [1], [0, 0, 1, 1], [], []>} : vector<16x128xbf16>, vector<128x64xbf16>, vector<16x64xf32> -> vector<16x64xf32>
    %39 = vector.broadcast %4 : vector<1x64xf32> to vector<16x64xf32>
    %40 = arith.addf %38, %39 : vector<16x64xf32>
    %c0_13 = arith.constant 0 : index
    %c0_14 = arith.constant 0 : index
    %41 = vector.load %arg6[%c0_13, %c0_14] : memref<3x128xf32, #tpu.memory_space<vmem>>, vector<3x128xf32>
    %c0_15 = arith.constant 0 : index
    %c0_16 = arith.constant 0 : index
    %42 = vector.load %arg7[%c0_15, %c0_16] : memref<1x128xf32, #tpu.memory_space<vmem>>, vector<1x128xf32>
    %c0_17 = arith.constant 0 : index
    %c0_18 = arith.constant 0 : index
    %43 = vector.load %arg8[%c0_17, %c0_18] : memref<128x64xbf16, #tpu.memory_space<vmem>>, vector<128x64xbf16>
    %c0_19 = arith.constant 0 : index
    %c0_20 = arith.constant 0 : index
    %44 = vector.load %arg9[%c0_19, %c0_20] : memref<1x64xf32, #tpu.memory_space<vmem>>, vector<1x64xf32>
    %45 = vector.extract_strided_slice %0 {offsets = [0, 0], sizes = [16, 1], strides = [1, 1]} : vector<16x3xf32> to vector<16x1xf32>
    %46 = vector.extract_strided_slice %41 {offsets = [0, 0], sizes = [1, 128], strides = [1, 1]} : vector<3x128xf32> to vector<1x128xf32>
    %47 = vector.broadcast %45 : vector<16x1xf32> to vector<16x128xf32>
    %48 = vector.broadcast %46 : vector<1x128xf32> to vector<16x128xf32>
    %49 = arith.mulf %47, %48 : vector<16x128xf32>
    %50 = vector.extract_strided_slice %0 {offsets = [0, 1], sizes = [16, 1], strides = [1, 1]} : vector<16x3xf32> to vector<16x1xf32>
    %51 = vector.extract_strided_slice %41 {offsets = [1, 0], sizes = [1, 128], strides = [1, 1]} : vector<3x128xf32> to vector<1x128xf32>
    %52 = vector.broadcast %50 : vector<16x1xf32> to vector<16x128xf32>
    %53 = vector.broadcast %51 : vector<1x128xf32> to vector<16x128xf32>
    %54 = arith.mulf %52, %53 : vector<16x128xf32>
    %55 = arith.addf %49, %54 : vector<16x128xf32>
    %56 = vector.extract_strided_slice %0 {offsets = [0, 2], sizes = [16, 1], strides = [1, 1]} : vector<16x3xf32> to vector<16x1xf32>
    %57 = vector.extract_strided_slice %41 {offsets = [2, 0], sizes = [1, 128], strides = [1, 1]} : vector<3x128xf32> to vector<1x128xf32>
    %58 = vector.broadcast %56 : vector<16x1xf32> to vector<16x128xf32>
    %59 = vector.broadcast %57 : vector<1x128xf32> to vector<16x128xf32>
    %60 = arith.mulf %58, %59 : vector<16x128xf32>
    %61 = arith.addf %55, %60 : vector<16x128xf32>
    %62 = vector.broadcast %42 : vector<1x128xf32> to vector<16x128xf32>
    %63 = arith.addf %61, %62 : vector<16x128xf32>
    %cst_21 = arith.constant 5.000000e-01 : f32
    %64 = vector.broadcast %cst_21 : f32 to vector<16x128xf32>
    %65 = arith.mulf %64, %63 : vector<16x128xf32>
    %cst_22 = arith.constant 4.471500e-02 : f32
    %66 = vector.broadcast %cst_22 : f32 to vector<16x128xf32>
    %67 = arith.mulf %66, %63 : vector<16x128xf32>
    %68 = arith.mulf %67, %63 : vector<16x128xf32>
    %69 = arith.mulf %68, %63 : vector<16x128xf32>
    %70 = arith.addf %63, %69 : vector<16x128xf32>
    %cst_23 = arith.constant 0.797884583 : f32
    %71 = vector.broadcast %cst_23 : f32 to vector<16x128xf32>
    %72 = arith.mulf %71, %70 : vector<16x128xf32>
    %73 = math.tanh %72 : vector<16x128xf32>
    %cst_24 = arith.constant 1.000000e+00 : f32
    %74 = vector.broadcast %cst_24 : f32 to vector<16x128xf32>
    %75 = arith.addf %74, %73 : vector<16x128xf32>
    %76 = arith.mulf %65, %75 : vector<16x128xf32>
    %77 = arith.truncf %76 : vector<16x128xf32> to vector<16x128xbf16>
    %cst_25 = arith.constant dense<0.000000e+00> : vector<16x64xf32>
    %78 = tpu.matmul %77, %43, %cst_25 {dimension_numbers = #tpu.dot_dimension_numbers<[1], [0], [0], [1], [0, 0, 1, 1], [], []>} : vector<16x128xbf16>, vector<128x64xbf16>, vector<16x64xf32> -> vector<16x64xf32>
    %79 = vector.broadcast %44 : vector<1x64xf32> to vector<16x64xf32>
    %80 = arith.addf %78, %79 : vector<16x64xf32>
    %81 = tpu.concatenate %40, %80 in 1 : vector<16x64xf32>, vector<16x64xf32> -> vector<16x128xf32>
    %c0_26 = arith.constant 0 : index
    %c0_27 = arith.constant 0 : index
    %82 = vector.load %arg10[%c0_26, %c0_27] : memref<16x128xf32, #tpu.memory_space<vmem>>, vector<16x128xf32>
    tpu.vector_store %arg10[%c0_26, %c0_27], %81 {strides = array<i32>} : memref<16x128xf32, #tpu.memory_space<vmem>>, vector<16x128xf32>,
    return
  }
  func.func @transform_0(%arg0: i32) -> (i32, i32) {
    %c0_i32 = arith.constant 0 : i32
    %c0_i32_0 = arith.constant 0 : i32
    %c0_i32_1 = arith.constant 0 : i32
    return %c0_i32, %c0_i32_0 : i32, i32
  }
  func.func @transform_1(%arg0: i32) -> (i32, i32) {
    %c0_i32 = arith.constant 0 : i32
    %c0_i32_0 = arith.constant 0 : i32
    %c0_i32_1 = arith.constant 0 : i32
    return %c0_i32, %c0_i32_0 : i32, i32
  }
  func.func @transform_2(%arg0: i32) -> (i32, i32) {
    %c0_i32 = arith.constant 0 : i32
    %c0_i32_0 = arith.constant 0 : i32
    %c0_i32_1 = arith.constant 0 : i32
    return %c0_i32, %c0_i32_0 : i32, i32
  }
  func.func @transform_3(%arg0: i32) -> (i32, i32) {
    %c0_i32 = arith.constant 0 : i32
    %c0_i32_0 = arith.constant 0 : i32
    %c0_i32_1 = arith.constant 0 : i32
    return %c0_i32, %c0_i32_0 : i32, i32
  }
  func.func @transform_4(%arg0: i32) -> (i32, i32) {
    %c0_i32 = arith.constant 0 : i32
    %c0_i32_0 = arith.constant 0 : i32
    %c0_i32_1 = arith.constant 0 : i32
    return %c0_i32, %c0_i32_0 : i32, i32
  }
  func.func @transform_5(%arg0: i32) -> (i32, i32) {
    %c0_i32 = arith.constant 0 : i32
    %c0_i32_0 = arith.constant 0 : i32
    %c0_i32_1 = arith.constant 0 : i32
    return %c0_i32, %c0_i32_0 : i32, i32
  }
  func.func @transform_6(%arg0: i32) -> (i32, i32) {
    %c0_i32 = arith.constant 0 : i32
    %c0_i32_0 = arith.constant 0 : i32
    %c0_i32_1 = arith.constant 0 : i32
    return %c0_i32, %c0_i32_0 : i32, i32
  }
  func.func @transform_7(%arg0: i32) -> (i32, i32) {
    %c0_i32 = arith.constant 0 : i32
    %c0_i32_0 = arith.constant 0 : i32
    %c0_i32_1 = arith.constant 0 : i32
    return %c0_i32, %c0_i32_0 : i32, i32
  }
  func.func @transform_8(%arg0: i32) -> (i32, i32) {
    %c0_i32 = arith.constant 0 : i32
    %c0_i32_0 = arith.constant 0 : i32
    %c0_i32_1 = arith.constant 0 : i32
    return %c0_i32, %c0_i32_0 : i32, i32
  }
  func.func @transform_9(%arg0: i32) -> (i32, i32) {
    %c0_i32 = arith.constant 0 : i32
    %c0_i32_0 = arith.constant 0 : i32
    %c0_i32_1 = arith.constant 0 : i32
    return %c0_i32, %c0_i32_0 : i32, i32
  }
}

</mosaic_0001>

<llo_original>
// kernel: tpu_custom_call.1
$region0: #{tpu_custom_call.1}
  #allocation0 [shape = 'u32[]', space=smem, size = 0x4, offset = 0x4, fixed_abs, tag = 'smem constant byte address 0x4 - core index']
  #allocation1 [shape = 'u32[144,128]{1,0:T(1,128)}', space=vmem, size = 0x12000, scoped, tag = 'internal scratch']
  %s0 = inlined_call_operand.vmem [shape: f32[16,3], index: 0, kind: input, shape index: {}]
  %s1 = inlined_call_operand.vmem [shape: f32[3,128], index: 1, kind: input, shape index: {}]
  %s2 = inlined_call_operand.vmem [shape: f32[1,128], index: 2, kind: input, shape index: {}]
  %s3 = inlined_call_operand.vmem [shape: bf16[128,64], index: 3, kind: input, shape index: {}]
  %s4 = inlined_call_operand.vmem [shape: f32[1,64], index: 4, kind: input, shape index: {}]
  %s5 = inlined_call_operand.vmem [shape: f32[3,128], index: 5, kind: input, shape index: {}]
  %s6 = inlined_call_operand.vmem [shape: f32[1,128], index: 6, kind: input, shape index: {}]
  %s7 = inlined_call_operand.vmem [shape: bf16[128,64], index: 7, kind: input, shape index: {}]
  %s8 = inlined_call_operand.vmem [shape: f32[1,64], index: 8, kind: input, shape index: {}]
  %s9 = inlined_call_operand.hbm [shape: f32[16,128], index: 9, kind: output, shape index: {}]
  %s10 = sld [smem:[#allocation0]]
  $region46: #{tpu_custom_call.1} parent=0
    _
  %s12 = ssub.s32 1, %s10
  %s13 = scalar_select 0, %s12, %s10
  $region1: #{tpu_custom_call.1} parent=0
    #allocation2 [shape = 'u8[8192]{0}', space=vmem, size = 0x2000, scoped, tag = 'output window, operand 0, single buffered']
    #allocation3 [shape = 's32[1]{0}', space=sflag, size = 0x4, scoped, tag = 'scoped memory for tpu_custom_call.1']
    %14 = vsyncpa [#allocation3], 0
    // Predicated region
    $region2: #{tpu_custom_call.1} parent=1 // pred_check
      _
    $region3: #{tpu_custom_call.1} parent=1 // pred_check_branch
      %16 = sbr.rel (0) target = $region5
    $region4: #{tpu_custom_call.1} parent=1 // pred_region
      _
    $region5: #{tpu_custom_call.1} parent=1 // pred_fallthru
      _
    // Predicated region
    $region6: #{tpu_custom_call.1} parent=1 // pred_check
      _
    $region7: #{tpu_custom_call.1} parent=1 // pred_check_branch
      %18 = sbr.rel (0) target = $region9
    $region8: #{tpu_custom_call.1} parent=1 // pred_region
      _
    $region9: #{tpu_custom_call.1} parent=1 // pred_fallthru
      _
    // Predicated region
    $region10: #{tpu_custom_call.1} parent=1 // pred_check
      _
    $region11: #{tpu_custom_call.1} parent=1 // pred_check_branch
      %20 = sbr.rel (0) target = $region13
    $region12: #{tpu_custom_call.1} parent=1 // pred_region
      _
    $region13: #{tpu_custom_call.1} parent=1 // pred_fallthru
      _
    // Predicated region
    $region14: #{tpu_custom_call.1} parent=1 // pred_check
      _
    $region15: #{tpu_custom_call.1} parent=1 // pred_check_branch
      %22 = sbr.rel (0) target = $region17
    $region16: #{tpu_custom_call.1} parent=1 // pred_region
      _
    $region17: #{tpu_custom_call.1} parent=1 // pred_fallthru
      _
    // Predicated region
    $region18: #{tpu_custom_call.1} parent=1 // pred_check
      _
    $region19: #{tpu_custom_call.1} parent=1 // pred_check_branch
      %24 = sbr.rel (0) target = $region21
    $region20: #{tpu_custom_call.1} parent=1 // pred_region
      _
    $region21: #{tpu_custom_call.1} parent=1 // pred_fallthru
      _
    // Predicated region
    $region22: #{tpu_custom_call.1} parent=1 // pred_check
      _
    $region23: #{tpu_custom_call.1} parent=1 // pred_check_branch
      %26 = sbr.rel (0) target = $region25
    $region24: #{tpu_custom_call.1} parent=1 // pred_region
      _
    $region25: #{tpu_custom_call.1} parent=1 // pred_fallthru
      _
    // Predicated region
    $region26: #{tpu_custom_call.1} parent=1 // pred_check
      _
    $region27: #{tpu_custom_call.1} parent=1 // pred_check_branch
      %28 = sbr.rel (0) target = $region29
    $region28: #{tpu_custom_call.1} parent=1 // pred_region
      _
    $region29: #{tpu_custom_call.1} parent=1 // pred_fallthru
      _
    // Predicated region
    $region30: #{tpu_custom_call.1} parent=1 // pred_check
      _
    $region31: #{tpu_custom_call.1} parent=1 // pred_check_branch
      %30 = sbr.rel (0) target = $region33
    $region32: #{tpu_custom_call.1} parent=1 // pred_region
      _
    $region33: #{tpu_custom_call.1} parent=1 // pred_fallthru
      _
    // Predicated region
    $region34: #{tpu_custom_call.1} parent=1 // pred_check
      _
    $region35: #{tpu_custom_call.1} parent=1 // pred_check_branch
      %32 = sbr.rel (0) target = $region37
    $region36: #{tpu_custom_call.1} parent=1 // pred_region
      _
    $region37: #{tpu_custom_call.1} parent=1 // pred_fallthru
      _
    %v34 = vld [vmem:[%s0] sm:$0xff]
    %v35 = vld [vmem:[%s0 + $0x8] sm:$0xff]
    %v36 = vld [vmem:[%s1] sm:$0x7]
    %v37 = vld [vmem:[%s2] sm:$0x1]
    %v38 = vld [vmem:[%s3] sm:$0xf]
    %v39 = vld [vmem:[%s3 + $0x4] sm:$0xf]
    %v40 = vld [vmem:[%s3 + $0x8] sm:$0xf]
    %v41 = vld [vmem:[%s3 + $0xc] sm:$0xf]
    %v42 = vld [vmem:[%s3 + $0x10] sm:$0xf]
    %v43 = vld [vmem:[%s3 + $0x14] sm:$0xf]
    %v44 = vld [vmem:[%s3 + $0x18] sm:$0xf]
    %v45 = vld [vmem:[%s3 + $0x1c] sm:$0xf]
    %v46 = vld [vmem:[%s3 + $0x20] sm:$0xf]
    %v47 = vld [vmem:[%s3 + $0x24] sm:$0xf]
    %v48 = vld [vmem:[%s3 + $0x28] sm:$0xf]
    %v49 = vld [vmem:[%s3 + $0x2c] sm:$0xf]
    %v50 = vld [vmem:[%s3 + $0x30] sm:$0xf]
    %v51 = vld [vmem:[%s3 + $0x34] sm:$0xf]
    %v52 = vld [vmem:[%s3 + $0x38] sm:$0xf]
    %v53 = vld [vmem:[%s3 + $0x3c] sm:$0xf]
    %v54 = vld [vmem:[%s4] sm:$0x1]
    %56 = vset.pattern.permute.xlu0 0
    %57 = vperm.xlu0 %56, %v34
    %v58 = vpop.permute.xlu0 %57
    %61 = vset.pattern.permute.xlu0 0
    %62 = vperm.xlu0 %61, %v35
    %v63 = vpop.permute.xlu0 %62
    %v65 = vlaneseq
    %v66 = vshrl.u32 %v65, 7
    %v67 = vsub.s32 0, %v66
    %v68 = vrot.slane %v36, %v67
    %v69 = vmul.f32 %v58, %v68
    %v70 = vmul.f32 %v63, %v68
    %71 = vset.pattern.permute.xlu0 1
    %72 = vperm.xlu0 %71, %v34
    %v73 = vpop.permute.xlu0 %72
    %75 = vset.pattern.permute.xlu0 1
    %76 = vperm.xlu0 %75, %v35
    %v77 = vpop.permute.xlu0 %76
    %v79 = vlaneseq
    %v80 = vshrl.u32 %v79, 7
    %v81 = vsub.s32 1, %v80
    %v82 = vrot.slane %v36, %v81
    %v83 = vmul.f32 %v73, %v82
    %v84 = vmul.f32 %v77, %v82
    %v85 = vadd.f32 %v69, %v83
    %v86 = vadd.f32 %v70, %v84
    %87 = vset.pattern.permute.xlu0 2
    %88 = vperm.xlu0 %87, %v34
    %v89 = vpop.permute.xlu0 %88
    %91 = vset.pattern.permute.xlu0 2
    %92 = vperm.xlu0 %91, %v35
    %v93 = vpop.permute.xlu0 %92
    %v95 = vlaneseq
    %v96 = vshrl.u32 %v95, 7
    %v97 = vsub.s32 2, %v96
    %v98 = vrot.slane %v36, %v97
    %v99 = vmul.f32 %v89, %v98
    %v100 = vmul.f32 %v93, %v98
    %v101 = vadd.f32 %v85, %v99
    %v102 = vadd.f32 %v86, %v100
    %v104 = vlaneseq
    %v105 = vshrl.u32 %v104, 7
    %v106 = vsub.s32 0, %v105
    %v107 = vrot.slane %v37, %v106
    %v109 = vadd.f32 %v101, %v107
    %v110 = vadd.f32 %v102, %v107
    %v111 = vmul.f32 %v109, 0.5
    %v112 = vmul.f32 %v110, 0.5
    %v113 = vmul.f32 %v109, 0.044715
    %v114 = vmul.f32 %v110, 0.044715
    %v115 = vmul.f32 %v113, %v109
    %v116 = vmul.f32 %v114, %v110
    %v117 = vmul.f32 %v115, %v109
    %v118 = vmul.f32 %v116, %v110
    %v119 = vadd.f32 %v109, %v117
    %v120 = vadd.f32 %v110, %v118
    %v121 = vmul.f32 %v119, 0.7978846
    %v122 = vmul.f32 %v120, 0.7978846
    %v123 = vtanh.pop %v121
    %v124 = vtanh.pop %v122
    %v125 = vadd.f32 %v123, 1.0
    %v126 = vadd.f32 %v124, 1.0
    %v127 = vmul.f32 %v111, %v125
    %v128 = vmul.f32 %v112, %v126
    %v129 = vpack.c.bf16 %v128, %v127
    %v131 = vlaneseq
    %v132 = vshrl.u32 %v131, 7
    %v133 = vsub.s32 0, %v132
    %v134 = vrot.slane %v54, %v133
    %v152 = vunpack.c.l.b16 %v38
    %v153 = vunpack.c.l.b16 %v39
    %v154 = vunpack.c.l.b16 %v40
    %v155 = vunpack.c.l.b16 %v41
    %v156 = vunpack.c.l.b16 %v42
    %v157 = vunpack.c.l.b16 %v43
    %v158 = vunpack.c.l.b16 %v44
    %v159 = vunpack.c.l.b16 %v45
    %v160 = vunpack.c.l.b16 %v46
    %v161 = vunpack.c.l.b16 %v47
    %v162 = vunpack.c.l.b16 %v48
    %v163 = vunpack.c.l.b16 %v49
    %v164 = vunpack.c.l.b16 %v50
    %v165 = vunpack.c.l.b16 %v51
    %v166 = vunpack.c.l.b16 %v52
    %v167 = vunpack.c.l.b16 %v53
    %v168 = vpack.c.b16 %v153, %v152
    %v169 = vpack.c.b16 %v155, %v154
    %v170 = vpack.c.b16 %v157, %v156
    %v171 = vpack.c.b16 %v159, %v158
    %v172 = vpack.c.b16 %v161, %v160
    %v173 = vpack.c.b16 %v163, %v162
    %v174 = vpack.c.b16 %v165, %v164
    %v175 = vpack.c.b16 %v167, %v166
    %184 = vmatprep.subr.bf16.mxu0 0
    %185 = vmatpush1.bf16.msra.mxu0 %v168
    %186 = vmatprep.subr.bf16.mxu0 0
    %187 = vmatpush1.bf16.msra.mxu0 %v169
    %188 = vmatprep.subr.bf16.mxu0 0
    %189 = vmatpush1.bf16.msra.mxu0 %v170
    %190 = vmatprep.subr.bf16.mxu0 0
    %191 = vmatpush1.bf16.msra.mxu0 %v171
    %192 = vmatprep.subr.bf16.mxu0 0
    %193 = vmatpush1.bf16.msra.mxu0 %v172
    %194 = vmatprep.subr.bf16.mxu0 0
    %195 = vmatpush1.bf16.msra.mxu0 %v173
    %196 = vmatprep.subr.bf16.mxu0 0
    %197 = vmatpush1.bf16.msra.mxu0 %v174
    %198 = vmatprep.subr.bf16.mxu0 0
    %199 = vmatpush1.bf16.msra.mxu0 %v175
    %200 = vmatprep.subr.bf16.mxu0 0
    %201 = vmatpush1.bf16.msra.mxu0 0
    %202 = vmatprep.subr.bf16.mxu0 0
    %203 = vmatpush1.bf16.msra.mxu0 0
    %204 = vmatprep.subr.bf16.mxu0 0
    %205 = vmatpush1.bf16.msra.mxu0 0
    %206 = vmatprep.subr.bf16.mxu0 0
    %207 = vmatpush1.bf16.msra.mxu0 0
    %208 = vmatprep.subr.bf16.mxu0 0
    %209 = vmatpush1.bf16.msra.mxu0 0
    %210 = vmatprep.subr.bf16.mxu0 0
    %211 = vmatpush1.bf16.msra.mxu0 0
    %212 = vmatprep.subr.bf16.mxu0 0
    %213 = vmatpush1.bf16.msra.mxu0 0
    %214 = vmatprep.subr.bf16.mxu0 0
    %215 = vmatpush1.bf16.msra.mxu0 0
    %216 = vmatprep.mubr.bf16.mxu0 0
    %217 = vmatmul.mubr.bf16.gmra.mrb[0].mxu0 %v129
    %v218 = vpop.f32.mrb[0].mxu0
    %v219 = vadd.f32 %v134, %v218
    %v220 = vpop.f32.mrb[0].mxu0
    %v221 = vpop.f32.mrb[0].mxu0
    %v222 = vadd.f32 %v134, %v221
    %v223 = vpop.f32.mrb[0].mxu0
    %224 = vdwg.mxu0
    %v225 = vld [vmem:[%s5] sm:$0x7]
    %v226 = vld [vmem:[%s6] sm:$0x1]
    %v227 = vld [vmem:[%s7] sm:$0xf]
    %v228 = vld [vmem:[%s7 + $0x4] sm:$0xf]
    %v229 = vld [vmem:[%s7 + $0x8] sm:$0xf]
    %v230 = vld [vmem:[%s7 + $0xc] sm:$0xf]
    %v231 = vld [vmem:[%s7 + $0x10] sm:$0xf]
    %v232 = vld [vmem:[%s7 + $0x14] sm:$0xf]
    %v233 = vld [vmem:[%s7 + $0x18] sm:$0xf]
    %v234 = vld [vmem:[%s7 + $0x1c] sm:$0xf]
    %v235 = vld [vmem:[%s7 + $0x20] sm:$0xf]
    %v236 = vld [vmem:[%s7 + $0x24] sm:$0xf]
    %v237 = vld [vmem:[%s7 + $0x28] sm:$0xf]
    %v238 = vld [vmem:[%s7 + $0x2c] sm:$0xf]
    %v239 = vld [vmem:[%s7 + $0x30] sm:$0xf]
    %v240 = vld [vmem:[%s7 + $0x34] sm:$0xf]
    %v241 = vld [vmem:[%s7 + $0x38] sm:$0xf]
    %v242 = vld [vmem:[%s7 + $0x3c] sm:$0xf]
    %v243 = vld [vmem:[%s8] sm:$0x1]
    %v244 = vlaneseq
    %v245 = vshrl.u32 %v244, 7
    %v246 = vsub.s32 0, %v245
    %v247 = vrot.slane %v225, %v246
    %v248 = vmul.f32 %v58, %v247
    %v249 = vmul.f32 %v63, %v247
    %v250 = vlaneseq
    %v251 = vshrl.u32 %v250, 7
    %v252 = vsub.s32 1, %v251
    %v253 = vrot.slane %v225, %v252
    %v254 = vmul.f32 %v73, %v253
    %v255 = vmul.f32 %v77, %v253
    %v256 = vadd.f32 %v248, %v254
    %v257 = vadd.f32 %v249, %v255
    %v258 = vlaneseq
    %v259 = vshrl.u32 %v258, 7
    %v260 = vsub.s32 2, %v259
    %v261 = vrot.slane %v225, %v260
    %v262 = vmul.f32 %v89, %v261
    %v263 = vmul.f32 %v93, %v261
    %v264 = vadd.f32 %v256, %v262
    %v265 = vadd.f32 %v257, %v263
    %v267 = vlaneseq
    %v268 = vshrl.u32 %v267, 7
    %v269 = vsub.s32 0, %v268
    %v270 = vrot.slane %v226, %v269
    %v272 = vadd.f32 %v264, %v270
    %v273 = vadd.f32 %v265, %v270
    %v274 = vmul.f32 %v272, 0.5
    %v275 = vmul.f32 %v273, 0.5
    %v276 = vmul.f32 %v272, 0.044715
    %v277 = vmul.f32 %v273, 0.044715
    %v278 = vmul.f32 %v276, %v272
    %v279 = vmul.f32 %v277, %v273
    %v280 = vmul.f32 %v278, %v272
    %v281 = vmul.f32 %v279, %v273
    %v282 = vadd.f32 %v272, %v280
    %v283 = vadd.f32 %v273, %v281
    %v284 = vmul.f32 %v282, 0.7978846
    %v285 = vmul.f32 %v283, 0.7978846
    %v286 = vtanh.pop %v284
    %v287 = vtanh.pop %v285
    %v288 = vadd.f32 %v286, 1.0
    %v289 = vadd.f32 %v287, 1.0
    %v290 = vmul.f32 %v274, %v288
    %v291 = vmul.f32 %v275, %v289
    %v292 = vpack.c.bf16 %v291, %v290
    %v294 = vlaneseq
    %v295 = vshrl.u32 %v294, 7
    %v296 = vsub.s32 0, %v295
    %v297 = vrot.slane %v243, %v296
    %v315 = vunpack.c.l.b16 %v227
    %v316 = vunpack.c.l.b16 %v228
    %v317 = vunpack.c.l.b16 %v229
    %v318 = vunpack.c.l.b16 %v230
    %v319 = vunpack.c.l.b16 %v231
    %v320 = vunpack.c.l.b16 %v232
    %v321 = vunpack.c.l.b16 %v233
    %v322 = vunpack.c.l.b16 %v234
    %v323 = vunpack.c.l.b16 %v235
    %v324 = vunpack.c.l.b16 %v236
    %v325 = vunpack.c.l.b16 %v237
    %v326 = vunpack.c.l.b16 %v238
    %v327 = vunpack.c.l.b16 %v239
    %v328 = vunpack.c.l.b16 %v240
    %v329 = vunpack.c.l.b16 %v241
    %v330 = vunpack.c.l.b16 %v242
    %v331 = vpack.c.b16 %v316, %v315
    %v332 = vpack.c.b16 %v318, %v317
    %v333 = vpack.c.b16 %v320, %v319
    %v334 = vpack.c.b16 %v322, %v321
    %v335 = vpack.c.b16 %v324, %v323
    %v336 = vpack.c.b16 %v326, %v325
    %v337 = vpack.c.b16 %v328, %v327
    %v338 = vpack.c.b16 %v330, %v329
    %347 = vmatprep.subr.bf16.mxu0 0
    %348 = vmatpush1.bf16.msra.mxu0 %v331
    %349 = vmatprep.subr.bf16.mxu0 0
    %350 = vmatpush1.bf16.msra.mxu0 %v332
    %351 = vmatprep.subr.bf16.mxu0 0
    %352 = vmatpush1.bf16.msra.mxu0 %v333
    %353 = vmatprep.subr.bf16.mxu0 0
    %354 = vmatpush1.bf16.msra.mxu0 %v334
    %355 = vmatprep.subr.bf16.mxu0 0
    %356 = vmatpush1.bf16.msra.mxu0 %v335
    %357 = vmatprep.subr.bf16.mxu0 0
    %358 = vmatpush1.bf16.msra.mxu0 %v336
    %359 = vmatprep.subr.bf16.mxu0 0
    %360 = vmatpush1.bf16.msra.mxu0 %v337
    %361 = vmatprep.subr.bf16.mxu0 0
    %362 = vmatpush1.bf16.msra.mxu0 %v338
    %363 = vmatprep.subr.bf16.mxu0 0
    %364 = vmatpush1.bf16.msra.mxu0 0
    %365 = vmatprep.subr.bf16.mxu0 0
    %366 = vmatpush1.bf16.msra.mxu0 0
    %367 = vmatprep.subr.bf16.mxu0 0
    %368 = vmatpush1.bf16.msra.mxu0 0
    %369 = vmatprep.subr.bf16.mxu0 0
    %370 = vmatpush1.bf16.msra.mxu0 0
    %371 = vmatprep.subr.bf16.mxu0 0
    %372 = vmatpush1.bf16.msra.mxu0 0
    %373 = vmatprep.subr.bf16.mxu0 0
    %374 = vmatpush1.bf16.msra.mxu0 0
    %375 = vmatprep.subr.bf16.mxu0 0
    %376 = vmatpush1.bf16.msra.mxu0 0
    %377 = vmatprep.subr.bf16.mxu0 0
    %378 = vmatpush1.bf16.msra.mxu0 0
    %379 = vmatprep.mubr.bf16.mxu0 0
    %380 = vmatmul.mubr.bf16.gmra.mrb[0].mxu0 %v292
    %v381 = vpop.f32.mrb[0].mxu0
    %v382 = vadd.f32 %v297, %v381
    %v383 = vpop.f32.mrb[0].mxu0
    %v384 = vpop.f32.mrb[0].mxu0
    %v385 = vadd.f32 %v297, %v384
    %v386 = vpop.f32.mrb[0].mxu0
    %387 = vdwg.mxu0
    %390 = vrot.lane.b32.xlu0 %v382, 64
    %v391 = vpop.permute.xlu0 %390
    %392 = vrot.lane.b32.xlu0 %v385, 64
    %v393 = vpop.permute.xlu0 %392
    %vm396 = vcmask 523264
    %v397 = vsel %vm396, %v219, %v391
    %v398 = vsel %vm396, %v222, %v393
    %399 = vst [vmem:[#allocation2] sm:$0xff] %v397
    %400 = vst [vmem:[#allocation2 + $0x8] sm:$0xff] %v398
    // Predicated region
    $region38: #{tpu_custom_call.1} parent=1 // pred_check
      _
    $region39: #{tpu_custom_call.1} parent=1 // pred_check_branch
      %402 = sbr.rel (0) target = $region41
    $region40: #{tpu_custom_call.1} parent=1 // pred_region
      %s404 = ssub.s32 256, 256
      %405 = vsyncadd [#allocation3], %s404
      %s406 = sshll.u32 [#allocation2], 4
      %s407 = int_to_ptr.vmem [resolvable:$true] %s406
      %412 = dma.vmem_to_hbm [thread:$0]  %s407, 256, %s9, [#allocation3], 128, 128, 8
    $region41: #{tpu_custom_call.1} parent=1 // pred_fallthru
      _
    // Predicated region
    $region42: #{tpu_custom_call.1} parent=1 // pred_check
      _
    $region43: #{tpu_custom_call.1} parent=1 // pred_check_branch
      %414 = sbr.rel (0) target = $region45
    $region44: #{tpu_custom_call.1} parent=1 // pred_region
      %415 = dma.done [#allocation3], 256
    $region45: #{tpu_custom_call.1} parent=1 // pred_fallthru
      _
    %416 = vsyncpa [#allocation3], 1

</llo_original>
